<compile_context>
chip_gen: v5e
topology: v5e:2x2
jax: 0.10.0
libtpu: 0.0.40
codegen_flags: <defaults>
</compile_context>

<pallas_src>
import math
import functools

import jax
import jax.numpy as jnp
from jax import lax
from jax.experimental import pallas as pl
from jax.experimental.pallas import tpu as pltpu


def _mha_fused_kernel(vl_ref,                                   # scalar-prefetch: (B,) int32 (SMEM)
                      q_ref, k_ref, v_ref,                      # (1,tq,Din), (1,Tk,Din), (1,Tk,Din) bf16
                      wq_ref, bq_ref,                           # (Din, nH*H) bf16, (1, nH*H) f32
                      wk_ref, bk_ref,
                      wv_ref, bv_ref,
                      wo_ref,                                   # (nH*H, E_pad) bf16
                      out_ref,                                  # (1, tq, E_pad) f32
                      *, num_heads, head_dim):
    b = pl.program_id(0)

    q = q_ref[0]                                                # (tq, Din) bf16
    k = k_ref[0]                                                # (Tk, Din) bf16
    v = v_ref[0]                                                # (Tk, Din) bf16

    # All-head projections: one bf16 MXU matmul each, f32 accumulate, f32 bias add.
    Qa = jnp.dot(q, wq_ref[...], preferred_element_type=jnp.float32) + bq_ref[...]   # (tq, C) f32
    Ka = jnp.dot(k, wk_ref[...], preferred_element_type=jnp.float32) + bk_ref[...]   # (Tk, C) f32
    Va = jnp.dot(v, wv_ref[...], preferred_element_type=jnp.float32) + bv_ref[...]   # (Tk, C) f32

    inv_sqrt_d = jnp.float32(1.0 / math.sqrt(head_dim))
    # Fold 1/sqrt(H) into Q (in f32), then drop to bf16 once for all MXU consumers.
    Qa = (Qa * inv_sqrt_d).astype(jnp.bfloat16)
    Ka = Ka.astype(jnp.bfloat16)
    Va = Va.astype(jnp.bfloat16)

    # masked_softmax: key positions >= valid_len[b] get -1e6 (matches the PyTorch constant).
    # Mask depends only on key index -> hoisted out of the per-head loop.
    valid_len = vl_ref[b]
    tq = q.shape[0]
    Tk = k.shape[0]
    key_ids = lax.broadcasted_iota(jnp.int32, (tq, Tk), 1)
    mask = key_ids < valid_len
    neg_big = jnp.float32(-1000000.0)

    # Per-head attention; output projection accumulated per head (no concat relayout).
    acc = jnp.zeros((tq, out_ref.shape[-1]), jnp.float32)
    for h in range(num_heads):                                  # static unroll (num_heads is small)
        lo = h * head_dim
        hi = lo + head_dim
        Qh = Qa[:, lo:hi]                                       # (tq, H) bf16
        Kh = Ka[:, lo:hi]                                       # (Tk, H) bf16
        Vh = Va[:, lo:hi]                                       # (Tk, H) bf16

        # Q @ K^T without materializing a transpose: contract last dims directly.
        scores = lax.dot_general(Qh, Kh, (((1,), (1,)), ((), ())),
                                 preferred_element_type=jnp.float32)   # (tq, Tk) f32
        scores = jnp.where(mask, scores, neg_big)

        # Softmax entirely in f32 (no bf16 VPU/EUP on v5e).
        m = jnp.max(scores, axis=-1, keepdims=True)
        p = jnp.exp(scores - m)
        denom = jnp.sum(p, axis=-1, keepdims=True)
        attn = (p * pl.reciprocal(denom, approx=True)).astype(jnp.bfloat16)   # EUP vrcp; free slot

        head_out = jnp.dot(attn, Vh, preferred_element_type=jnp.float32)      # (tq, H) f32
        # Output Linear (bias=False) accumulated per head: acc += head_h @ wo[h*H:(h+1)*H, :]
        acc = acc + jnp.dot(head_out.astype(jnp.bfloat16), wo_ref[lo:hi, :],
                            preferred_element_type=jnp.float32)

    out_ref[0] = acc                                            # lane-dense (tq, E_pad) store


def _pick_tq(Tq):
    if Tq % 256 == 0:
        return 256
    if Tq % 128 == 0:
        return 128
    return Tq


def multi_head_attention(queries, keys, values, params, valid_lens=None):
    """queries/keys/values: (B, Tq/Tk/Tk, D_in) float32; valid_lens: (B,) int32 or None."""
    B, Tq, Din = queries.shape
    _, Tk, _ = keys.shape
    wq, bq, wk, bk, wv, bv, wo = params
    num_heads, _, H = wq.shape
    C = num_heads * H
    E = wo.shape[-1]

    # Fuse per-head weights head-major along the output dim so in-kernel column slice
    # [h*H:(h+1)*H] corresponds exactly to head h (== torch.cat ordering). bf16 for the MXU.
    wq_cat = jnp.transpose(wq, (1, 0, 2)).reshape(Din, C).astype(jnp.bfloat16)
    wk_cat = jnp.transpose(wk, (1, 0, 2)).reshape(Din, C).astype(jnp.bfloat16)
    wv_cat = jnp.transpose(wv, (1, 0, 2)).reshape(Din, C).astype(jnp.bfloat16)
    bq_cat = bq.reshape(1, C).astype(jnp.float32)
    bk_cat = bk.reshape(1, C).astype(jnp.float32)
    bv_cat = bv.reshape(1, C).astype(jnp.float32)

    # Lane-dense output: pad embed dim to a multiple of 128 (zero columns in wo), slice after.
    E_pad = ((E + 127) // 128) * 128
    if E_pad != E:
        wo_p = jnp.zeros((C, E_pad), wo.dtype).at[:, :E].set(wo)
    else:
        wo_p = wo
    wo_p = wo_p.astype(jnp.bfloat16)

    q_bf = queries.astype(jnp.bfloat16)
    k_bf = keys.astype(jnp.bfloat16)
    v_bf = values.astype(jnp.bfloat16)

    if valid_lens is None:
        # full-length mask is a no-op, identical to the unmasked softmax branch
        valid_lens = jnp.full((B,), Tk, dtype=jnp.int32)
    valid_lens = valid_lens.astype(jnp.int32)

    tq = _pick_tq(Tq)
    n_tq = Tq // tq

    kernel = functools.partial(_mha_fused_kernel, num_heads=num_heads, head_dim=H)

    # Explicit VMEM budget (v5e scoped default is only 16 MiB): double-buffered blocks +
    # intermediates, 2x headroom, clamped to [32 MiB, 64 MiB] (v7x physical ceiling per TC).
    def _nbytes(shape, dt):
        return math.prod(shape) * jnp.dtype(dt).itemsize
    blocks = (2 * (_nbytes((1, tq, Din), jnp.bfloat16)
                   + 2 * _nbytes((1, Tk, Din), jnp.bfloat16)
                   + _nbytes((1, tq, E_pad), jnp.float32))
              + 2 * (3 * _nbytes((Din, C), jnp.bfloat16)
                     + 3 * _nbytes((1, C), jnp.float32)
                     + _nbytes((C, E_pad), jnp.bfloat16)))
    interm = (3 * _nbytes((max(tq, Tk), C), jnp.float32)
              + 3 * _nbytes((tq, Tk), jnp.float32)
              + _nbytes((tq, E_pad), jnp.float32))
    vmem_limit = int(min(64 * 2**20, max(32 * 2**20, 2 * (blocks + interm))))

    out = pl.pallas_call(
        kernel,
        out_shape=jax.ShapeDtypeStruct((B, Tq, E_pad), jnp.float32),
        grid_spec=pltpu.PrefetchScalarGridSpec(
            num_scalar_prefetch=1,
            grid=(B, n_tq),
            in_specs=[
                pl.BlockSpec((1, tq, Din), lambda b, qi, vl: (b, qi, 0)),   # queries (tiled in Tq)
                pl.BlockSpec((1, Tk, Din), lambda b, qi, vl: (b, 0, 0)),    # keys
                pl.BlockSpec((1, Tk, Din), lambda b, qi, vl: (b, 0, 0)),    # values
                pl.BlockSpec((Din, C),     lambda b, qi, vl: (0, 0)),       # wq (all heads)
                pl.BlockSpec((1, C),       lambda b, qi, vl: (0, 0)),       # bq
                pl.BlockSpec((Din, C),     lambda b, qi, vl: (0, 0)),       # wk
                pl.BlockSpec((1, C),       lambda b, qi, vl: (0, 0)),       # bk
                pl.BlockSpec((Din, C),     lambda b, qi, vl: (0, 0)),       # wv
                pl.BlockSpec((1, C),       lambda b, qi, vl: (0, 0)),       # bv
                pl.BlockSpec((C, E_pad),   lambda b, qi, vl: (0, 0)),       # wo (zero-padded cols)
            ],
            out_specs=pl.BlockSpec((1, tq, E_pad), lambda b, qi, vl: (b, qi, 0)),
        ),
        compiler_params=pltpu.CompilerParams(
            dimension_semantics=("parallel", "parallel"),
            vmem_limit_bytes=vmem_limit),
    )(valid_lens, q_bf, k_bf, v_bf,
      wq_cat, bq_cat, wk_cat, bk_cat, wv_cat, bv_cat, wo_p)

    return out[..., :E] if E_pad != E else out


def init_params(key, num_heads, num_hidden, embed_dim, d_in):
    ks = jax.random.split(key, 7)
    scale_in = 1.0 / math.sqrt(d_in)
    wq = jax.random.uniform(ks[0], (num_heads, d_in, num_hidden), jnp.float32, -scale_in, scale_in)
    bq = jax.random.uniform(ks[1], (num_heads, 1, num_hidden), jnp.float32, -scale_in, scale_in)
    wk = jax.random.uniform(ks[2], (num_heads, d_in, num_hidden), jnp.float32, -scale_in, scale_in)
    bk = jax.random.uniform(ks[3], (num_heads, 1, num_hidden), jnp.float32, -scale_in, scale_in)
    wv = jax.random.uniform(ks[4], (num_heads, d_in, num_hidden), jnp.float32, -scale_in, scale_in)
    bv = jax.random.uniform(ks[5], (num_heads, 1, num_hidden), jnp.float32, -scale_in, scale_in)
    scale_o = 1.0 / math.sqrt(num_heads * num_hidden)
    wo = jax.random.uniform(ks[6], (num_heads * num_hidden, embed_dim), jnp.float32, -scale_o, scale_o)
    # output LazyLinear called with bias=False -> no bias term.
    return (wq, bq, wk, bk, wv, bv, wo)


def _reference(queries, keys, values, params, valid_lens):
    """Pure-JAX f32 reference mirroring the PyTorch forward, for a sanity check."""
    wq, bq, wk, bk, wv, bv, wo = params
    Tk = keys.shape[1]
    heads = []
    for h in range(wq.shape[0]):
        Q = queries @ wq[h] + bq[h]
        K = keys @ wk[h] + bk[h]
        V = values @ wv[h] + bv[h]
        scores = jnp.einsum("bqd,bkd->bqk", Q, K) / math.sqrt(Q.shape[-1])
        if valid_lens is not None:
            mask = jnp.arange(Tk)[None, None, :] < valid_lens[:, None, None]
            scores = jnp.where(mask, scores, -1000000.0)
        attn = jax.nn.softmax(scores, axis=-1)
        heads.append(jnp.einsum("bqk,bkd->bqd", attn, V))
    return jnp.concatenate(heads, axis=-1) @ wo


if __name__ == "__main__":
    # Small deterministic config: batch=2, seq=8, embed_dim=32, num_heads=4, num_hidden=16.
    B, T, E = 2, 8, 32
    num_heads, num_hidden = 4, 16

    root = jax.random.PRNGKey(0)
    k_q, k_k, k_v, k_p = jax.random.split(root, 4)
    queries = jax.random.normal(k_q, (B, T, E), jnp.float32)
    keys = jax.random.normal(k_k, (B, T, E), jnp.float32)
    values = jax.random.normal(k_v, (B, T, E), jnp.float32)
    valid_lens = jnp.array([5, 8], dtype=jnp.int32)

    params = init_params(k_p, num_heads, num_hidden, E, E)

    out = multi_head_attention(queries, keys, values, params, valid_lens)
    out = jax.block_until_ready(out)

    ref = _reference(queries, keys, values, params, valid_lens)
    assert out.shape == (B, T, E), out.shape
    # tolerance accommodates bf16 MXU operands + pl.reciprocal(approx=True)
    assert jnp.allclose(out, ref, atol=2.5e-2, rtol=2.5e-2), float(jnp.max(jnp.abs(out - ref)))

    print("KERNEL_OK")
</pallas_src>

<mosaic_0001>
module attributes {stable_mosaic.version = 11 : i64} {
  func.func @_mha_fused_kernel(%arg0: i32, %arg1: i32, %arg2: memref<2xi32, #tpu.memory_space<smem>>, %arg3: memref<1x8x32xbf16, #tpu.memory_space<vmem>>, %arg4: memref<1x8x32xbf16, #tpu.memory_space<vmem>>, %arg5: memref<1x8x32xbf16, #tpu.memory_space<vmem>>, %arg6: memref<32x64xbf16, #tpu.memory_space<vmem>>, %arg7: memref<1x64xf32, #tpu.memory_space<vmem>>, %arg8: memref<32x64xbf16, #tpu.memory_space<vmem>>, %arg9: memref<1x64xf32, #tpu.memory_space<vmem>>, %arg10: memref<32x64xbf16, #tpu.memory_space<vmem>>, %arg11: memref<1x64xf32, #tpu.memory_space<vmem>>, %arg12: memref<64x128xbf16, #tpu.memory_space<vmem>>, %arg13: memref<1x8x128xf32, #tpu.memory_space<vmem>>) attributes {dimension_semantics = [#tpu.dimension_semantics<parallel>, #tpu.dimension_semantics<parallel>], iteration_bounds = array<i64: 2, 1>, scalar_prefetch = 1 : i64, scratch_operands = 0 : i64, tpu.core_type = #tpu.core_type<tc>, window_params = [{transform_indices = @transform_0, window_bounds = array<i64: 1, 8, 32>}, {transform_indices = @transform_1, window_bounds = array<i64: 1, 8, 32>}, {transform_indices = @transform_2, window_bounds = array<i64: 1, 8, 32>}, {pipeline_mode = #tpu.pipeline_mode<synchronous>, transform_indices = @transform_3, window_bounds = array<i64: 32, 64>}, {pipeline_mode = #tpu.pipeline_mode<synchronous>, transform_indices = @transform_4, window_bounds = array<i64: 1, 64>}, {pipeline_mode = #tpu.pipeline_mode<synchronous>, transform_indices = @transform_5, window_bounds = array<i64: 32, 64>}, {pipeline_mode = #tpu.pipeline_mode<synchronous>, transform_indices = @transform_6, window_bounds = array<i64: 1, 64>}, {pipeline_mode = #tpu.pipeline_mode<synchronous>, transform_indices = @transform_7, window_bounds = array<i64: 32, 64>}, {pipeline_mode = #tpu.pipeline_mode<synchronous>, transform_indices = @transform_8, window_bounds = array<i64: 1, 64>}, {pipeline_mode = #tpu.pipeline_mode<synchronous>, transform_indices = @transform_9, window_bounds = array<i64: 64, 128>}, {transform_indices = @transform_10, window_bounds = array<i64: 1, 8, 128>}]} {
    %c0 = arith.constant 0 : index
    %c0_0 = arith.constant 0 : index
    %c0_1 = arith.constant 0 : index
    %0 = vector.load %arg3[%c0, %c0_0, %c0_1] : memref<1x8x32xbf16, #tpu.memory_space<vmem>>, vector<1x8x32xbf16>
    %1 = vector.shape_cast %0 : vector<1x8x32xbf16> to vector<8x32xbf16>
    %c0_2 = arith.constant 0 : index
    %c0_3 = arith.constant 0 : index
    %c0_4 = arith.constant 0 : index
    %2 = vector.load %arg4[%c0_2, %c0_3, %c0_4] : memref<1x8x32xbf16, #tpu.memory_space<vmem>>, vector<1x8x32xbf16>
    %3 = vector.shape_cast %2 : vector<1x8x32xbf16> to vector<8x32xbf16>
    %c0_5 = arith.constant 0 : index
    %c0_6 = arith.constant 0 : index
    %c0_7 = arith.constant 0 : index
    %4 = vector.load %arg5[%c0_5, %c0_6, %c0_7] : memref<1x8x32xbf16, #tpu.memory_space<vmem>>, vector<1x8x32xbf16>
    %5 = vector.shape_cast %4 : vector<1x8x32xbf16> to vector<8x32xbf16>
    %c0_8 = arith.constant 0 : index
    %c0_9 = arith.constant 0 : index
    %6 = vector.load %arg6[%c0_8, %c0_9] : memref<32x64xbf16, #tpu.memory_space<vmem>>, vector<32x64xbf16>
    %cst = arith.constant dense<0.000000e+00> : vector<8x64xf32>
    %7 = tpu.matmul %1, %6, %cst {dimension_numbers = #tpu.dot_dimension_numbers<[1], [0], [0], [1], [0, 0, 1, 1], [], []>} : vector<8x32xbf16>, vector<32x64xbf16>, vector<8x64xf32> -> vector<8x64xf32>
    %c0_10 = arith.constant 0 : index
    %c0_11 = arith.constant 0 : index
    %8 = vector.load %arg7[%c0_10, %c0_11] : memref<1x64xf32, #tpu.memory_space<vmem>>, vector<1x64xf32>
    %9 = vector.broadcast %8 : vector<1x64xf32> to vector<8x64xf32>
    %10 = arith.addf %7, %9 : vector<8x64xf32>
    %c0_12 = arith.constant 0 : index
    %c0_13 = arith.constant 0 : index
    %11 = vector.load %arg8[%c0_12, %c0_13] : memref<32x64xbf16, #tpu.memory_space<vmem>>, vector<32x64xbf16>
    %cst_14 = arith.constant dense<0.000000e+00> : vector<8x64xf32>
    %12 = tpu.matmul %3, %11, %cst_14 {dimension_numbers = #tpu.dot_dimension_numbers<[1], [0], [0], [1], [0, 0, 1, 1], [], []>} : vector<8x32xbf16>, vector<32x64xbf16>, vector<8x64xf32> -> vector<8x64xf32>
    %c0_15 = arith.constant 0 : index
    %c0_16 = arith.constant 0 : index
    %13 = vector.load %arg9[%c0_15, %c0_16] : memref<1x64xf32, #tpu.memory_space<vmem>>, vector<1x64xf32>
    %14 = vector.broadcast %13 : vector<1x64xf32> to vector<8x64xf32>
    %15 = arith.addf %12, %14 : vector<8x64xf32>
    %c0_17 = arith.constant 0 : index
    %c0_18 = arith.constant 0 : index
    %16 = vector.load %arg10[%c0_17, %c0_18] : memref<32x64xbf16, #tpu.memory_space<vmem>>, vector<32x64xbf16>
    %cst_19 = arith.constant dense<0.000000e+00> : vector<8x64xf32>
    %17 = tpu.matmul %5, %16, %cst_19 {dimension_numbers = #tpu.dot_dimension_numbers<[1], [0], [0], [1], [0, 0, 1, 1], [], []>} : vector<8x32xbf16>, vector<32x64xbf16>, vector<8x64xf32> -> vector<8x64xf32>
    %c0_20 = arith.constant 0 : index
    %c0_21 = arith.constant 0 : index
    %18 = vector.load %arg11[%c0_20, %c0_21] : memref<1x64xf32, #tpu.memory_space<vmem>>, vector<1x64xf32>
    %19 = vector.broadcast %18 : vector<1x64xf32> to vector<8x64xf32>
    %20 = arith.addf %17, %19 : vector<8x64xf32>
    %cst_22 = arith.constant 2.500000e-01 : f32
    %21 = vector.broadcast %cst_22 : f32 to vector<8x64xf32>
    %22 = arith.mulf %10, %21 : vector<8x64xf32>
    %23 = arith.truncf %22 : vector<8x64xf32> to vector<8x64xbf16>
    %24 = arith.truncf %15 : vector<8x64xf32> to vector<8x64xbf16>
    %25 = arith.truncf %20 : vector<8x64xf32> to vector<8x64xbf16>
    %26 = arith.index_cast %arg0 : i32 to index
    %27 = memref.load %arg2[%26] : memref<2xi32, #tpu.memory_space<smem>>
    %28 = tpu.iota {dimensions = array<i32: 1>} : vector<8x8xi32>
    %29 = vector.broadcast %27 : i32 to vector<8x8xi32>
    %30 = arith.cmpi slt, %28, %29 : vector<8x8xi32>
    %cst_23 = arith.constant 0.000000e+00 : f32
    %31 = vector.broadcast %cst_23 : f32 to vector<8x128xf32>
    %32 = vector.extract_strided_slice %23 {offsets = [0, 0], sizes = [8, 16], strides = [1, 1]} : vector<8x64xbf16> to vector<8x16xbf16>
    %33 = vector.extract_strided_slice %24 {offsets = [0, 0], sizes = [8, 16], strides = [1, 1]} : vector<8x64xbf16> to vector<8x16xbf16>
    %34 = vector.extract_strided_slice %25 {offsets = [0, 0], sizes = [8, 16], strides = [1, 1]} : vector<8x64xbf16> to vector<8x16xbf16>
    %cst_24 = arith.constant dense<0.000000e+00> : vector<8x8xf32>
    %35 = tpu.matmul %32, %33, %cst_24 {dimension_numbers = #tpu.dot_dimension_numbers<[1], [1], [0], [0], [0, 0, 1, 0], [], []>} : vector<8x16xbf16>, vector<8x16xbf16>, vector<8x8xf32> -> vector<8x8xf32>
    %cst_25 = arith.constant -1.000000e+06 : f32
    %36 = vector.broadcast %cst_25 : f32 to vector<8x8xf32>
    %37 = arith.select %30, %35, %36 : vector<8x8xi1>, vector<8x8xf32>
    %cst_26 = arith.constant dense<0xFF800000> : vector<8xf32>
    %38 = vector.multi_reduction <maximumf>, %37, %cst_26 [1] : vector<8x8xf32> to vector<8xf32>
    %39 = vector.shape_cast %38 : vector<8xf32> to vector<8x1xf32>
    %40 = vector.broadcast %39 : vector<8x1xf32> to vector<8x8xf32>
    %41 = arith.subf %37, %40 : vector<8x8xf32>
    %42 = math.exp %41 : vector<8x8xf32>
    %cst_27 = arith.constant dense<0.000000e+00> : vector<8xf32>
    %43 = vector.multi_reduction <add>, %42, %cst_27 [1] : vector<8x8xf32> to vector<8xf32>
    %44 = vector.shape_cast %43 : vector<8xf32> to vector<8x1xf32>
    %45 = tpu.reciprocal %44 {approx = true} : vector<8x1xf32> -> vector<8x1xf32>
    %46 = vector.broadcast %45 : vector<8x1xf32> to vector<8x8xf32>
    %47 = arith.mulf %42, %46 : vector<8x8xf32>
    %48 = arith.truncf %47 : vector<8x8xf32> to vector<8x8xbf16>
    %cst_28 = arith.constant dense<0.000000e+00> : vector<8x16xf32>
    %49 = tpu.matmul %48, %34, %cst_28 {dimension_numbers = #tpu.dot_dimension_numbers<[1], [0], [0], [1], [0, 0, 1, 1], [], []>} : vector<8x8xbf16>, vector<8x16xbf16>, vector<8x16xf32> -> vector<8x16xf32>
    %50 = arith.truncf %49 : vector<8x16xf32> to vector<8x16xbf16>
    %c0_29 = arith.constant 0 : index
    %c0_30 = arith.constant 0 : index
    %51 = vector.load %arg12[%c0_29, %c0_30] : memref<64x128xbf16, #tpu.memory_space<vmem>>, vector<16x128xbf16>
    %cst_31 = arith.constant dense<0.000000e+00> : vector<8x128xf32>
    %52 = tpu.matmul %50, %51, %cst_31 {dimension_numbers = #tpu.dot_dimension_numbers<[1], [0], [0], [1], [0, 0, 1, 1], [], []>} : vector<8x16xbf16>, vector<16x128xbf16>, vector<8x128xf32> -> vector<8x128xf32>
    %53 = arith.addf %31, %52 : vector<8x128xf32>
    %54 = vector.extract_strided_slice %23 {offsets = [0, 16], sizes = [8, 16], strides = [1, 1]} : vector<8x64xbf16> to vector<8x16xbf16>
    %55 = vector.extract_strided_slice %24 {offsets = [0, 16], sizes = [8, 16], strides = [1, 1]} : vector<8x64xbf16> to vector<8x16xbf16>
    %56 = vector.extract_strided_slice %25 {offsets = [0, 16], sizes = [8, 16], strides = [1, 1]} : vector<8x64xbf16> to vector<8x16xbf16>
    %cst_32 = arith.constant dense<0.000000e+00> : vector<8x8xf32>
    %57 = tpu.matmul %54, %55, %cst_32 {dimension_numbers = #tpu.dot_dimension_numbers<[1], [1], [0], [0], [0, 0, 1, 0], [], []>} : vector<8x16xbf16>, vector<8x16xbf16>, vector<8x8xf32> -> vector<8x8xf32>
    %cst_33 = arith.constant -1.000000e+06 : f32
    %58 = vector.broadcast %cst_33 : f32 to vector<8x8xf32>
    %59 = arith.select %30, %57, %58 : vector<8x8xi1>, vector<8x8xf32>
    %cst_34 = arith.constant dense<0xFF800000> : vector<8xf32>
    %60 = vector.multi_reduction <maximumf>, %59, %cst_34 [1] : vector<8x8xf32> to vector<8xf32>
    %61 = vector.shape_cast %60 : vector<8xf32> to vector<8x1xf32>
    %62 = vector.broadcast %61 : vector<8x1xf32> to vector<8x8xf32>
    %63 = arith.subf %59, %62 : vector<8x8xf32>
    %64 = math.exp %63 : vector<8x8xf32>
    %cst_35 = arith.constant dense<0.000000e+00> : vector<8xf32>
    %65 = vector.multi_reduction <add>, %64, %cst_35 [1] : vector<8x8xf32> to vector<8xf32>
    %66 = vector.shape_cast %65 : vector<8xf32> to vector<8x1xf32>
    %67 = tpu.reciprocal %66 {approx = true} : vector<8x1xf32> -> vector<8x1xf32>
    %68 = vector.broadcast %67 : vector<8x1xf32> to vector<8x8xf32>
    %69 = arith.mulf %64, %68 : vector<8x8xf32>
    %70 = arith.truncf %69 : vector<8x8xf32> to vector<8x8xbf16>
    %cst_36 = arith.constant dense<0.000000e+00> : vector<8x16xf32>
    %71 = tpu.matmul %70, %56, %cst_36 {dimension_numbers = #tpu.dot_dimension_numbers<[1], [0], [0], [1], [0, 0, 1, 1], [], []>} : vector<8x8xbf16>, vector<8x16xbf16>, vector<8x16xf32> -> vector<8x16xf32>
    %72 = arith.truncf %71 : vector<8x16xf32> to vector<8x16xbf16>
    %c16 = arith.constant 16 : index
    %c0_37 = arith.constant 0 : index
    %73 = vector.load %arg12[%c16, %c0_37] : memref<64x128xbf16, #tpu.memory_space<vmem>>, vector<16x128xbf16>
    %cst_38 = arith.constant dense<0.000000e+00> : vector<8x128xf32>
    %74 = tpu.matmul %72, %73, %cst_38 {dimension_numbers = #tpu.dot_dimension_numbers<[1], [0], [0], [1], [0, 0, 1, 1], [], []>} : vector<8x16xbf16>, vector<16x128xbf16>, vector<8x128xf32> -> vector<8x128xf32>
    %75 = arith.addf %53, %74 : vector<8x128xf32>
    %76 = vector.extract_strided_slice %23 {offsets = [0, 32], sizes = [8, 16], strides = [1, 1]} : vector<8x64xbf16> to vector<8x16xbf16>
    %77 = vector.extract_strided_slice %24 {offsets = [0, 32], sizes = [8, 16], strides = [1, 1]} : vector<8x64xbf16> to vector<8x16xbf16>
    %78 = vector.extract_strided_slice %25 {offsets = [0, 32], sizes = [8, 16], strides = [1, 1]} : vector<8x64xbf16> to vector<8x16xbf16>
    %cst_39 = arith.constant dense<0.000000e+00> : vector<8x8xf32>
    %79 = tpu.matmul %76, %77, %cst_39 {dimension_numbers = #tpu.dot_dimension_numbers<[1], [1], [0], [0], [0, 0, 1, 0], [], []>} : vector<8x16xbf16>, vector<8x16xbf16>, vector<8x8xf32> -> vector<8x8xf32>
    %cst_40 = arith.constant -1.000000e+06 : f32
    %80 = vector.broadcast %cst_40 : f32 to vector<8x8xf32>
    %81 = arith.select %30, %79, %80 : vector<8x8xi1>, vector<8x8xf32>
    %cst_41 = arith.constant dense<0xFF800000> : vector<8xf32>
    %82 = vector.multi_reduction <maximumf>, %81, %cst_41 [1] : vector<8x8xf32> to vector<8xf32>
    %83 = vector.shape_cast %82 : vector<8xf32> to vector<8x1xf32>
    %84 = vector.broadcast %83 : vector<8x1xf32> to vector<8x8xf32>
    %85 = arith.subf %81, %84 : vector<8x8xf32>
    %86 = math.exp %85 : vector<8x8xf32>
    %cst_42 = arith.constant dense<0.000000e+00> : vector<8xf32>
    %87 = vector.multi_reduction <add>, %86, %cst_42 [1] : vector<8x8xf32> to vector<8xf32>
    %88 = vector.shape_cast %87 : vector<8xf32> to vector<8x1xf32>
    %89 = tpu.reciprocal %88 {approx = true} : vector<8x1xf32> -> vector<8x1xf32>
    %90 = vector.broadcast %89 : vector<8x1xf32> to vector<8x8xf32>
    %91 = arith.mulf %86, %90 : vector<8x8xf32>
    %92 = arith.truncf %91 : vector<8x8xf32> to vector<8x8xbf16>
    %cst_43 = arith.constant dense<0.000000e+00> : vector<8x16xf32>
    %93 = tpu.matmul %92, %78, %cst_43 {dimension_numbers = #tpu.dot_dimension_numbers<[1], [0], [0], [1], [0, 0, 1, 1], [], []>} : vector<8x8xbf16>, vector<8x16xbf16>, vector<8x16xf32> -> vector<8x16xf32>
    %94 = arith.truncf %93 : vector<8x16xf32> to vector<8x16xbf16>
    %c32 = arith.constant 32 : index
    %c0_44 = arith.constant 0 : index
    %95 = vector.load %arg12[%c32, %c0_44] : memref<64x128xbf16, #tpu.memory_space<vmem>>, vector<16x128xbf16>
    %cst_45 = arith.constant dense<0.000000e+00> : vector<8x128xf32>
    %96 = tpu.matmul %94, %95, %cst_45 {dimension_numbers = #tpu.dot_dimension_numbers<[1], [0], [0], [1], [0, 0, 1, 1], [], []>} : vector<8x16xbf16>, vector<16x128xbf16>, vector<8x128xf32> -> vector<8x128xf32>
    %97 = arith.addf %75, %96 : vector<8x128xf32>
    %98 = vector.extract_strided_slice %23 {offsets = [0, 48], sizes = [8, 16], strides = [1, 1]} : vector<8x64xbf16> to vector<8x16xbf16>
    %99 = vector.extract_strided_slice %24 {offsets = [0, 48], sizes = [8, 16], strides = [1, 1]} : vector<8x64xbf16> to vector<8x16xbf16>
    %100 = vector.extract_strided_slice %25 {offsets = [0, 48], sizes = [8, 16], strides = [1, 1]} : vector<8x64xbf16> to vector<8x16xbf16>
    %cst_46 = arith.constant dense<0.000000e+00> : vector<8x8xf32>
    %101 = tpu.matmul %98, %99, %cst_46 {dimension_numbers = #tpu.dot_dimension_numbers<[1], [1], [0], [0], [0, 0, 1, 0], [], []>} : vector<8x16xbf16>, vector<8x16xbf16>, vector<8x8xf32> -> vector<8x8xf32>
    %cst_47 = arith.constant -1.000000e+06 : f32
    %102 = vector.broadcast %cst_47 : f32 to vector<8x8xf32>
    %103 = arith.select %30, %101, %102 : vector<8x8xi1>, vector<8x8xf32>
    %cst_48 = arith.constant dense<0xFF800000> : vector<8xf32>
    %104 = vector.multi_reduction <maximumf>, %103, %cst_48 [1] : vector<8x8xf32> to vector<8xf32>
    %105 = vector.shape_cast %104 : vector<8xf32> to vector<8x1xf32>
    %106 = vector.broadcast %105 : vector<8x1xf32> to vector<8x8xf32>
    %107 = arith.subf %103, %106 : vector<8x8xf32>
    %108 = math.exp %107 : vector<8x8xf32>
    %cst_49 = arith.constant dense<0.000000e+00> : vector<8xf32>
    %109 = vector.multi_reduction <add>, %108, %cst_49 [1] : vector<8x8xf32> to vector<8xf32>
    %110 = vector.shape_cast %109 : vector<8xf32> to vector<8x1xf32>
    %111 = tpu.reciprocal %110 {approx = true} : vector<8x1xf32> -> vector<8x1xf32>
    %112 = vector.broadcast %111 : vector<8x1xf32> to vector<8x8xf32>
    %113 = arith.mulf %108, %112 : vector<8x8xf32>
    %114 = arith.truncf %113 : vector<8x8xf32> to vector<8x8xbf16>
    %cst_50 = arith.constant dense<0.000000e+00> : vector<8x16xf32>
    %115 = tpu.matmul %114, %100, %cst_50 {dimension_numbers = #tpu.dot_dimension_numbers<[1], [0], [0], [1], [0, 0, 1, 1], [], []>} : vector<8x8xbf16>, vector<8x16xbf16>, vector<8x16xf32> -> vector<8x16xf32>
    %116 = arith.truncf %115 : vector<8x16xf32> to vector<8x16xbf16>
    %c48 = arith.constant 48 : index
    %c0_51 = arith.constant 0 : index
    %117 = vector.load %arg12[%c48, %c0_51] : memref<64x128xbf16, #tpu.memory_space<vmem>>, vector<16x128xbf16>
    %cst_52 = arith.constant dense<0.000000e+00> : vector<8x128xf32>
    %118 = tpu.matmul %116, %117, %cst_52 {dimension_numbers = #tpu.dot_dimension_numbers<[1], [0], [0], [1], [0, 0, 1, 1], [], []>} : vector<8x16xbf16>, vector<16x128xbf16>, vector<8x128xf32> -> vector<8x128xf32>
    %119 = arith.addf %97, %118 : vector<8x128xf32>
    %c0_53 = arith.constant 0 : index
    %c0_54 = arith.constant 0 : index
    %c0_55 = arith.constant 0 : index
    %120 = vector.load %arg13[%c0_53, %c0_54, %c0_55] : memref<1x8x128xf32, #tpu.memory_space<vmem>>, vector<1x8x128xf32>
    %121 = vector.shape_cast %120 : vector<1x8x128xf32> to vector<8x128xf32>
    %122 = vector.shape_cast %119 : vector<8x128xf32> to vector<1x8x128xf32>
    tpu.vector_store %arg13[%c0_53, %c0_54, %c0_55], %122 {strides = array<i32>} : memref<1x8x128xf32, #tpu.memory_space<vmem>>, vector<1x8x128xf32>,
    return
  }
  func.func @transform_0(%arg0: i32, %arg1: i32, %arg2: memref<2xi32, #tpu.memory_space<smem>>) -> (i32, i32, i32) {
    %c0_i32 = arith.constant 0 : i32
    %c0_i32_0 = arith.constant 0 : i32
    return %arg0, %arg1, %c0_i32 : i32, i32, i32
  }
  func.func @transform_1(%arg0: i32, %arg1: i32, %arg2: memref<2xi32, #tpu.memory_space<smem>>) -> (i32, i32, i32) {
    %c0_i32 = arith.constant 0 : i32
    %c0_i32_0 = arith.constant 0 : i32
    %c0_i32_1 = arith.constant 0 : i32
    return %arg0, %c0_i32, %c0_i32_0 : i32, i32, i32
  }
  func.func @transform_2(%arg0: i32, %arg1: i32, %arg2: memref<2xi32, #tpu.memory_space<smem>>) -> (i32, i32, i32) {
    %c0_i32 = arith.constant 0 : i32
    %c0_i32_0 = arith.constant 0 : i32
    %c0_i32_1 = arith.constant 0 : i32
    return %arg0, %c0_i32, %c0_i32_0 : i32, i32, i32
  }
  func.func @transform_3(%arg0: i32, %arg1: i32, %arg2: memref<2xi32, #tpu.memory_space<smem>>) -> (i32, i32) {
    %c0_i32 = arith.constant 0 : i32
    %c0_i32_0 = arith.constant 0 : i32
    %c0_i32_1 = arith.constant 0 : i32
    return %c0_i32, %c0_i32_0 : i32, i32
  }
  func.func @transform_4(%arg0: i32, %arg1: i32, %arg2: memref<2xi32, #tpu.memory_space<smem>>) -> (i32, i32) {
    %c0_i32 = arith.constant 0 : i32
    %c0_i32_0 = arith.constant 0 : i32
    %c0_i32_1 = arith.constant 0 : i32
    return %c0_i32, %c0_i32_0 : i32, i32
  }
  func.func @transform_5(%arg0: i32, %arg1: i32, %arg2: memref<2xi32, #tpu.memory_space<smem>>) -> (i32, i32) {
    %c0_i32 = arith.constant 0 : i32
    %c0_i32_0 = arith.constant 0 : i32
    %c0_i32_1 = arith.constant 0 : i32
    return %c0_i32, %c0_i32_0 : i32, i32
  }
  func.func @transform_6(%arg0: i32, %arg1: i32, %arg2: memref<2xi32, #tpu.memory_space<smem>>) -> (i32, i32) {
    %c0_i32 = arith.constant 0 : i32
    %c0_i32_0 = arith.constant 0 : i32
    %c0_i32_1 = arith.constant 0 : i32
    return %c0_i32, %c0_i32_0 : i32, i32
  }
  func.func @transform_7(%arg0: i32, %arg1: i32, %arg2: memref<2xi32, #tpu.memory_space<smem>>) -> (i32, i32) {
    %c0_i32 = arith.constant 0 : i32
    %c0_i32_0 = arith.constant 0 : i32
    %c0_i32_1 = arith.constant 0 : i32
    return %c0_i32, %c0_i32_0 : i32, i32
  }
  func.func @transform_8(%arg0: i32, %arg1: i32, %arg2: memref<2xi32, #tpu.memory_space<smem>>) -> (i32, i32) {
    %c0_i32 = arith.constant 0 : i32
    %c0_i32_0 = arith.constant 0 : i32
    %c0_i32_1 = arith.constant 0 : i32
    return %c0_i32, %c0_i32_0 : i32, i32
  }
  func.func @transform_9(%arg0: i32, %arg1: i32, %arg2: memref<2xi32, #tpu.memory_space<smem>>) -> (i32, i32) {
    %c0_i32 = arith.constant 0 : i32
    %c0_i32_0 = arith.constant 0 : i32
    %c0_i32_1 = arith.constant 0 : i32
    return %c0_i32, %c0_i32_0 : i32, i32
  }
  func.func @transform_10(%arg0: i32, %arg1: i32, %arg2: memref<2xi32, #tpu.memory_space<smem>>) -> (i32, i32, i32) {
    %c0_i32 = arith.constant 0 : i32
    %c0_i32_0 = arith.constant 0 : i32
    return %arg0, %arg1, %c0_i32 : i32, i32, i32
  }
}

</mosaic_0001>

<llo_original>
// kernel: tpu_custom_call.1
$region0: #{tpu_custom_call.1}
  #allocation0 [shape = 'u32[]', space=smem, size = 0x4, offset = 0x4, fixed_abs, tag = 'smem constant byte address 0x4 - core index']
  #allocation1 [shape = 'u32[72,128]{1,0:T(1,128)}', space=vmem, size = 0x9000, scoped, tag = 'internal scratch']
  #allocation2 [shape = 's32[1]{0}', space=sflag, size = 0x4, scoped, tag = 'scoped memory for tpu_custom_call.1']
  #allocation3 [shape = 'u8[512]{0}', space=smem, size = 0x200, scoped, tag = 'prefetched SMEM operand 0']
  %s0 = inlined_call_operand.hbm [shape: s32[2], index: 0, kind: input, shape index: {}]
  %s1 = inlined_call_operand.hbm [shape: bf16[2,8,32], index: 1, kind: input, shape index: {}]
  %s2 = inlined_call_operand.hbm [shape: bf16[2,8,32], index: 2, kind: input, shape index: {}]
  %s3 = inlined_call_operand.hbm [shape: bf16[2,8,32], index: 3, kind: input, shape index: {}]
  %s4 = inlined_call_operand.hbm [shape: bf16[32,64], index: 4, kind: input, shape index: {}]
  %s5 = inlined_call_operand.vmem [shape: f32[1,64], index: 5, kind: input, shape index: {}]
  %s6 = inlined_call_operand.hbm [shape: bf16[32,64], index: 6, kind: input, shape index: {}]
  %s7 = inlined_call_operand.vmem [shape: f32[1,64], index: 7, kind: input, shape index: {}]
  %s8 = inlined_call_operand.hbm [shape: bf16[32,64], index: 8, kind: input, shape index: {}]
  %s9 = inlined_call_operand.vmem [shape: f32[1,64], index: 9, kind: input, shape index: {}]
  %s10 = inlined_call_operand.hbm [shape: bf16[64,128], index: 10, kind: input, shape index: {}]
  %s11 = inlined_call_operand.hbm [shape: f32[2,8,128], index: 11, kind: output, shape index: {}]
  %s12 = sld [smem:[#allocation0]]
  $region101: #{tpu_custom_call.1} parent=0
    _
  %s14 = ssub.s32 1, %s12
  %s15 = scalar_select 0, %s14, %s12
  %s17 = sshll.u32 %s0, 4
  %s18 = int_to_ptr.hbm [resolvable:$true] %s17
  %20 = dma.hbm_to_smem %s18, 16, [#allocation3], [#allocation2]
  %22 = dma.done [#allocation2], 16
  %23 = sfence
  $region1: #{tpu_custom_call.1} parent=0
    #allocation4 [shape = 'u8[4096]{0}', space=vmem, size = 0x1000, scoped, tag = 'input window, operand 1']
    #allocation5 [shape = 's32[2]{0}', space=sflag, size = 0x8, scoped, tag = 'scoped memory for tpu_custom_call.1']
    #allocation6 [shape = 's32[2]{0}', space=sflag, size = 0x8, scoped, tag = 'scoped memory for tpu_custom_call.1']
    #allocation7 [shape = 'u8[4096]{0}', space=vmem, size = 0x1000, scoped, tag = 'input window, operand 2']
    #allocation8 [shape = 's32[2]{0}', space=sflag, size = 0x8, scoped, tag = 'scoped memory for tpu_custom_call.1']
    #allocation9 [shape = 'u8[4096]{0}', space=vmem, size = 0x1000, scoped, tag = 'input window, operand 3']
    #allocation10 [shape = 'u8[8192]{0}', space=vmem, size = 0x2000, scoped, tag = 'input window, operand 4, single buffered']
    #allocation11 [shape = 's32[1]{0}', space=sflag, size = 0x4, scoped, tag = 'scoped memory for tpu_custom_call.1']
    #allocation12 [shape = 'u8[8192]{0}', space=vmem, size = 0x2000, scoped, tag = 'input window, operand 6, single buffered']
    #allocation13 [shape = 'u8[8192]{0}', space=vmem, size = 0x2000, scoped, tag = 'input window, operand 8, single buffered']
    #allocation14 [shape = 's32[1]{0}', space=sflag, size = 0x4, scoped, tag = 'scoped memory for tpu_custom_call.1']
    #allocation15 [shape = 'u8[16384]{0}', space=vmem, size = 0x4000, scoped, tag = 'input window, operand 10, single buffered']
    #allocation16 [shape = 'u8[8192]{0}', space=vmem, size = 0x2000, scoped, tag = 'output window, operand 0']
    %24 = vsyncpa [#allocation5], 0
    %s25 = scalar_lea.sflag [#allocation5], 1
    %26 = vsyncpa %s25, 0
    %27 = vsyncpa [#allocation8], 0
    %s28 = scalar_lea.sflag [#allocation8], 1
    %29 = vsyncpa %s28, 0
    %30 = vsyncpa [#allocation11], 0
    %31 = vsyncpa [#allocation14], 0
    %32 = vsyncpa [#allocation6], 0
    %s33 = scalar_lea.sflag [#allocation6], 1
    %34 = vsyncpa %s33, 0
    loop: start=0, step=1, limit=4
    $region2: #{tpu_custom_call.1} parent=1 // loop_pre_header
      _
    $region3: #{tpu_custom_call.1} parent=1 // loop_header
      %s36 = sphi 0, %s40
      %p37 = scmp.ge.s32.totalorder %s36, 4
      %s43 = sphi 0, %s55
      %s44 = sphi 0, %s51
      %s45 = sphi 0, %s43
      %s46 = sphi 0, %s44
      %s47 = sphi 0, %s45
      %s48 = sphi 0, %s46
      %s60 = sphi 0, %s62
      %s63 = sphi 0, %s60
      %s64 = sphi 0, %s63
      %s80 = sphi 0, %s64
      %s86 = sphi 0, %s88
      %s89 = sphi 0, %s86
      %s90 = sphi 0, %s89
      %s106 = sphi 0, %s90
      %s112 = sphi 0, %s114
      %s115 = sphi 0, %s112
      %s116 = sphi 0, %s115
      %s132 = sphi 0, %s116
      %s136 = sphi 0, %s136
      %s138 = sphi 0, %s136
      %s139 = sphi 0, %s138
      %s153 = sphi 0, %s139
      %s157 = sphi 0, %s157
      %s159 = sphi 0, %s157
      %s160 = sphi 0, %s159
      %s174 = sphi 0, %s160
      %s178 = sphi 0, %s178
      %s180 = sphi 0, %s178
      %s181 = sphi 0, %s180
      %s195 = sphi 0, %s181
      %s199 = sphi 0, %s199
      %s201 = sphi 0, %s199
      %s202 = sphi 0, %s201
      %s216 = sphi 0, %s202
      %s220 = sphi 0, %s220
      %s222 = sphi 0, %s220
      %s223 = sphi 0, %s222
      %s237 = sphi 0, %s223
      %s241 = sphi 0, %s241
      %s243 = sphi 0, %s241
      %s244 = sphi 0, %s243
      %s258 = sphi 0, %s244
      %s262 = sphi 0, %s262
      %s264 = sphi 0, %s262
      %s265 = sphi 0, %s264
      %s279 = sphi 0, %s265
      %s287 = sphi 0, %s289
      %s290 = sphi 0, %s287
      %s291 = sphi 0, %s290
      %s307 = sphi 0, %s291
    $region4: #{tpu_custom_call.1} parent=1 // loop_header_branch
      %39 = sbr.rel (%p37) target = $region8
    $region5: #{tpu_custom_call.1} parent=1 // loop_body
      %s41 = ssub.s32 %s36, 1
      %s42 = ssub.s32 %s36, 2
      %s49 = sadd.s32 1, %s44
      %p50 = scmp.ge.s32.totalorder %s49, 1
      %s51 = scalar_select %p50, 0, %s49
      %s52 = sadd.s32 1, %s43
      %s53 = scalar_select %p50, %s52, %s43
      %p54 = scmp.ge.s32.totalorder %s53, 2
      %s55 = scalar_select %p54, 0, %s53
      %s56 = ssub.s32 %s43, %s55
      %s57 = ssub.s32 %s44, %s51
      %s58 = sor.u32 %s56, %s57
      %p59 = scmp.eq.s32.totalorder %s58, 0
      %s61 = sadd.s32 %s60, 1
      %s62 = scalar_select %p59, %s60, %s61
      %p65 = pneg %p59
      %p66 = scmp.eq.s32.totalorder %s36, 1
      %p67 = por %p65, %p66
      %p68 = scmp.ne.s32.totalorder %s60, %s63
      %p69 = scmp.eq.s32.totalorder %s36, 0
      %p70 = por %p68, %p69
      %p71 = scmp.ne.s32.totalorder %s60, %s63
      %p72 = scmp.eq.s32.totalorder %s41, 1
      %p73 = por %p71, %p72
      %p74 = scmp.ne.s32.totalorder %s63, %s64
      %p75 = scmp.eq.s32.totalorder %s41, 0
      %p76 = por %p74, %p75
      %p77 = scmp.ne.s32.totalorder %s63, %s64
      %p78 = scmp.eq.s32.totalorder %s42, 1
      %p79 = por %p77, %p78
      %p81 = scmp.ne.s32.totalorder %s64, %s80
      %p82 = scmp.eq.s32.totalorder %s42, 0
      %p83 = por %p81, %p82
      %s84 = ssub.s32 %s43, %s55
      %p85 = scmp.eq.s32.totalorder %s84, 0
      %s87 = sadd.s32 %s86, 1
      %s88 = scalar_select %p85, %s86, %s87
      %p91 = pneg %p85
      %p92 = scmp.eq.s32.totalorder %s36, 1
      %p93 = por %p91, %p92
      %p94 = scmp.ne.s32.totalorder %s86, %s89
      %p95 = scmp.eq.s32.totalorder %s36, 0
      %p96 = por %p94, %p95
      %p97 = scmp.ne.s32.totalorder %s86, %s89
      %p98 = scmp.eq.s32.totalorder %s41, 1
      %p99 = por %p97, %p98
      %p100 = scmp.ne.s32.totalorder %s89, %s90
      %p101 = scmp.eq.s32.totalorder %s41, 0
      %p102 = por %p100, %p101
      %p103 = scmp.ne.s32.totalorder %s89, %s90
      %p104 = scmp.eq.s32.totalorder %s42, 1
      %p105 = por %p103, %p104
      %p107 = scmp.ne.s32.totalorder %s90, %s106
      %p108 = scmp.eq.s32.totalorder %s42, 0
      %p109 = por %p107, %p108
      %s110 = ssub.s32 %s43, %s55
      %p111 = scmp.eq.s32.totalorder %s110, 0
      %s113 = sadd.s32 %s112, 1
      %s114 = scalar_select %p111, %s112, %s113
      %p117 = pneg %p111
      %p118 = scmp.eq.s32.totalorder %s36, 1
      %p119 = por %p117, %p118
      %p120 = scmp.ne.s32.totalorder %s112, %s115
      %p121 = scmp.eq.s32.totalorder %s36, 0
      %p122 = por %p120, %p121
      %p123 = scmp.ne.s32.totalorder %s112, %s115
      %p124 = scmp.eq.s32.totalorder %s41, 1
      %p125 = por %p123, %p124
      %p126 = scmp.ne.s32.totalorder %s115, %s116
      %p127 = scmp.eq.s32.totalorder %s41, 0
      %p128 = por %p126, %p127
      %p129 = scmp.ne.s32.totalorder %s115, %s116
      %p130 = scmp.eq.s32.totalorder %s42, 1
      %p131 = por %p129, %p130
      %p133 = scmp.ne.s32.totalorder %s116, %s132
      %p134 = scmp.eq.s32.totalorder %s42, 0
      %p135 = por %p133, %p134
      %s137 = sadd.s32 %s136, 1
      %p140 = scmp.eq.s32.totalorder %s36, 1
      %p141 = scmp.ne.s32.totalorder %s136, %s138
      %p142 = scmp.eq.s32.totalorder %s36, 0
      %p143 = por %p141, %p142
      %p144 = scmp.ne.s32.totalorder %s136, %s138
      %p145 = scmp.eq.s32.totalorder %s41, 1
      %p146 = por %p144, %p145
      %p147 = scmp.ne.s32.totalorder %s138, %s139
      %p148 = scmp.eq.s32.totalorder %s41, 0
      %p149 = por %p147, %p148
      %p150 = scmp.ne.s32.totalorder %s138, %s139
      %p151 = scmp.eq.s32.totalorder %s42, 1
      %p152 = por %p150, %p151
      %p154 = scmp.ne.s32.totalorder %s139, %s153
      %p155 = scmp.eq.s32.totalorder %s42, 0
      %p156 = por %p154, %p155
      %s158 = sadd.s32 %s157, 1
      %p161 = scmp.eq.s32.totalorder %s36, 1
      %p162 = scmp.ne.s32.totalorder %s157, %s159
      %p163 = scmp.eq.s32.totalorder %s36, 0
      %p164 = por %p162, %p163
      %p165 = scmp.ne.s32.totalorder %s157, %s159
      %p166 = scmp.eq.s32.totalorder %s41, 1
      %p167 = por %p165, %p166
      %p168 = scmp.ne.s32.totalorder %s159, %s160
      %p169 = scmp.eq.s32.totalorder %s41, 0
      %p170 = por %p168, %p169
      %p171 = scmp.ne.s32.totalorder %s159, %s160
      %p172 = scmp.eq.s32.totalorder %s42, 1
      %p173 = por %p171, %p172
      %p175 = scmp.ne.s32.totalorder %s160, %s174
      %p176 = scmp.eq.s32.totalorder %s42, 0
      %p177 = por %p175, %p176
      %s179 = sadd.s32 %s178, 1
      %p182 = scmp.eq.s32.totalorder %s36, 1
      %p183 = scmp.ne.s32.totalorder %s178, %s180
      %p184 = scmp.eq.s32.totalorder %s36, 0
      %p185 = por %p183, %p184
      %p186 = scmp.ne.s32.totalorder %s178, %s180
      %p187 = scmp.eq.s32.totalorder %s41, 1
      %p188 = por %p186, %p187
      %p189 = scmp.ne.s32.totalorder %s180, %s181
      %p190 = scmp.eq.s32.totalorder %s41, 0
      %p191 = por %p189, %p190
      %p192 = scmp.ne.s32.totalorder %s180, %s181
      %p193 = scmp.eq.s32.totalorder %s42, 1
      %p194 = por %p192, %p193
      %p196 = scmp.ne.s32.totalorder %s181, %s195
      %p197 = scmp.eq.s32.totalorder %s42, 0
      %p198 = por %p196, %p197
      %s200 = sadd.s32 %s199, 1
      %p203 = scmp.eq.s32.totalorder %s36, 1
      %p204 = scmp.ne.s32.totalorder %s199, %s201
      %p205 = scmp.eq.s32.totalorder %s36, 0
      %p206 = por %p204, %p205
      %p207 = scmp.ne.s32.totalorder %s199, %s201
      %p208 = scmp.eq.s32.totalorder %s41, 1
      %p209 = por %p207, %p208
      %p210 = scmp.ne.s32.totalorder %s201, %s202
      %p211 = scmp.eq.s32.totalorder %s41, 0
      %p212 = por %p210, %p211
      %p213 = scmp.ne.s32.totalorder %s201, %s202
      %p214 = scmp.eq.s32.totalorder %s42, 1
      %p215 = por %p213, %p214
      %p217 = scmp.ne.s32.totalorder %s202, %s216
      %p218 = scmp.eq.s32.totalorder %s42, 0
      %p219 = por %p217, %p218
      %s221 = sadd.s32 %s220, 1
      %p224 = scmp.eq.s32.totalorder %s36, 1
      %p225 = scmp.ne.s32.totalorder %s220, %s222
      %p226 = scmp.eq.s32.totalorder %s36, 0
      %p227 = por %p225, %p226
      %p228 = scmp.ne.s32.totalorder %s220, %s222
      %p229 = scmp.eq.s32.totalorder %s41, 1
      %p230 = por %p228, %p229
      %p231 = scmp.ne.s32.totalorder %s222, %s223
      %p232 = scmp.eq.s32.totalorder %s41, 0
      %p233 = por %p231, %p232
      %p234 = scmp.ne.s32.totalorder %s222, %s223
      %p235 = scmp.eq.s32.totalorder %s42, 1
      %p236 = por %p234, %p235
      %p238 = scmp.ne.s32.totalorder %s223, %s237
      %p239 = scmp.eq.s32.totalorder %s42, 0
      %p240 = por %p238, %p239
      %s242 = sadd.s32 %s241, 1
      %p245 = scmp.eq.s32.totalorder %s36, 1
      %p246 = scmp.ne.s32.totalorder %s241, %s243
      %p247 = scmp.eq.s32.totalorder %s36, 0
      %p248 = por %p246, %p247
      %p249 = scmp.ne.s32.totalorder %s241, %s243
      %p250 = scmp.eq.s32.totalorder %s41, 1
      %p251 = por %p249, %p250
      %p252 = scmp.ne.s32.totalorder %s243, %s244
      %p253 = scmp.eq.s32.totalorder %s41, 0
      %p254 = por %p252, %p253
      %p255 = scmp.ne.s32.totalorder %s243, %s244
      %p256 = scmp.eq.s32.totalorder %s42, 1
      %p257 = por %p255, %p256
      %p259 = scmp.ne.s32.totalorder %s244, %s258
      %p260 = scmp.eq.s32.totalorder %s42, 0
      %p261 = por %p259, %p260
      %s263 = sadd.s32 %s262, 1
      %p266 = scmp.eq.s32.totalorder %s36, 1
      %p267 = scmp.ne.s32.totalorder %s262, %s264
      %p268 = scmp.eq.s32.totalorder %s36, 0
      %p269 = por %p267, %p268
      %p270 = scmp.ne.s32.totalorder %s262, %s264
      %p271 = scmp.eq.s32.totalorder %s41, 1
      %p272 = por %p270, %p271
      %p273 = scmp.ne.s32.totalorder %s264, %s265
      %p274 = scmp.eq.s32.totalorder %s41, 0
      %p275 = por %p273, %p274
      %p276 = scmp.ne.s32.totalorder %s264, %s265
      %p277 = scmp.eq.s32.totalorder %s42, 1
      %p278 = por %p276, %p277
      %p280 = scmp.ne.s32.totalorder %s265, %s279
      %p281 = scmp.eq.s32.totalorder %s42, 0
      %p282 = por %p280, %p281
      %s283 = ssub.s32 %s43, %s55
      %s284 = ssub.s32 %s44, %s51
      %s285 = sor.u32 %s283, %s284
      %p286 = scmp.eq.s32.totalorder %s285, 0
      %s288 = sadd.s32 %s287, 1
      %s289 = scalar_select %p286, %s287, %s288
      %p292 = pneg %p286
      %p293 = scmp.eq.s32.totalorder %s36, 1
      %p294 = por %p292, %p293
      %p295 = scmp.ne.s32.totalorder %s287, %s290
      %p296 = scmp.eq.s32.totalorder %s36, 0
      %p297 = por %p295, %p296
      %p298 = scmp.ne.s32.totalorder %s287, %s290
      %p299 = scmp.eq.s32.totalorder %s41, 1
      %p300 = por %p298, %p299
      %p301 = scmp.ne.s32.totalorder %s290, %s291
      %p302 = scmp.eq.s32.totalorder %s41, 0
      %p303 = por %p301, %p302
      %p304 = scmp.ne.s32.totalorder %s290, %s291
      %p305 = scmp.eq.s32.totalorder %s42, 1
      %p306 = por %p304, %p305
      %p308 = scmp.ne.s32.totalorder %s291, %s307
      %p309 = scmp.eq.s32.totalorder %s42, 0
      %p310 = por %p308, %p309
      %p311 = scmp.le.s32.totalorder 1, %s36
      %p312 = scmp.lt.s32.totalorder %s36, 3
      %p313 = pnand %p311, %p312
      %p314 = pneg %p313
      // Predicated region
      $region9: #{tpu_custom_call.1} parent=5 // pred_check
        _
      $region10: #{tpu_custom_call.1} parent=5 // pred_check_branch
        %316 = sbr.rel (%p313) target = $region12
      $region11: #{tpu_custom_call.1} parent=5 // pred_region
        %s317 = ssub.s32 %s36, 1
        // Predicated region
        $region13: #{tpu_custom_call.1} parent=11 // pred_check
          %p318 = pneg %p149
        $region14: #{tpu_custom_call.1} parent=11 // pred_check_branch
          %320 = sbr.rel (%p318) target = $region16
        $region15: #{tpu_custom_call.1} parent=11 // pred_region
          %322 = vsyncadd [#allocation11], 0
          %s323 = sshll.u32 %s4, 4
          %s324 = int_to_ptr.hbm [resolvable:$true] %s323
          %s325 = sshll.u32 [#allocation10], 4
          %s326 = int_to_ptr.vmem [resolvable:$true] %s325
          %331 = dma.hbm_to_vmem [thread:$0]  %s324, 256, %s326, [#allocation11], 64, 64, 4
        $region16: #{tpu_custom_call.1} parent=11 // pred_fallthru
          _
        // Predicated region
        $region17: #{tpu_custom_call.1} parent=11 // pred_check
          %p332 = pneg %p170
        $region18: #{tpu_custom_call.1} parent=11 // pred_check_branch
          %334 = sbr.rel (%p332) target = $region20
        $region19: #{tpu_custom_call.1} parent=11 // pred_region
          _
        $region20: #{tpu_custom_call.1} parent=11 // pred_fallthru
          _
        // Predicated region
        $region21: #{tpu_custom_call.1} parent=11 // pred_check
          %p335 = pneg %p191
        $region22: #{tpu_custom_call.1} parent=11 // pred_check_branch
          %337 = sbr.rel (%p335) target = $region24
        $region23: #{tpu_custom_call.1} parent=11 // pred_region
          %339 = vsyncadd [#allocation11], 0
          %s340 = sshll.u32 %s6, 4
          %s341 = int_to_ptr.hbm [resolvable:$true] %s340
          %s342 = sshll.u32 [#allocation12], 4
          %s343 = int_to_ptr.vmem [resolvable:$true] %s342
          %348 = dma.hbm_to_vmem [thread:$0]  %s341, 256, %s343, [#allocation11], 64, 64, 4
        $region24: #{tpu_custom_call.1} parent=11 // pred_fallthru
          _
        // Predicated region
        $region25: #{tpu_custom_call.1} parent=11 // pred_check
          %p349 = pneg %p212
        $region26: #{tpu_custom_call.1} parent=11 // pred_check_branch
          %351 = sbr.rel (%p349) target = $region28
        $region27: #{tpu_custom_call.1} parent=11 // pred_region
          _
        $region28: #{tpu_custom_call.1} parent=11 // pred_fallthru
          _
        // Predicated region
        $region29: #{tpu_custom_call.1} parent=11 // pred_check
          %p352 = pneg %p233
        $region30: #{tpu_custom_call.1} parent=11 // pred_check_branch
          %354 = sbr.rel (%p352) target = $region32
        $region31: #{tpu_custom_call.1} parent=11 // pred_region
          %356 = vsyncadd [#allocation14], 0
          %s357 = sshll.u32 %s8, 4
          %s358 = int_to_ptr.hbm [resolvable:$true] %s357
          %s359 = sshll.u32 [#allocation13], 4
          %s360 = int_to_ptr.vmem [resolvable:$true] %s359
          %365 = dma.hbm_to_vmem [thread:$0]  %s358, 256, %s360, [#allocation14], 64, 64, 4
        $region32: #{tpu_custom_call.1} parent=11 // pred_fallthru
          _
        // Predicated region
        $region33: #{tpu_custom_call.1} parent=11 // pred_check
          %p366 = pneg %p254
        $region34: #{tpu_custom_call.1} parent=11 // pred_check_branch
          %368 = sbr.rel (%p366) target = $region36
        $region35: #{tpu_custom_call.1} parent=11 // pred_region
          _
        $region36: #{tpu_custom_call.1} parent=11 // pred_fallthru
          _
        // Predicated region
        $region37: #{tpu_custom_call.1} parent=11 // pred_check
          %p369 = pneg %p275
        $region38: #{tpu_custom_call.1} parent=11 // pred_check_branch
          %371 = sbr.rel (%p369) target = $region40
        $region39: #{tpu_custom_call.1} parent=11 // pred_region
          %373 = vsyncadd [#allocation14], 0
          %s374 = sshll.u32 %s10, 4
          %s375 = int_to_ptr.hbm [resolvable:$true] %s374
          %s376 = sshll.u32 [#allocation15], 4
          %s377 = int_to_ptr.vmem [resolvable:$true] %s376
          %382 = dma.hbm_to_vmem [thread:$0]  %s375, 512, %s377, [#allocation14], 64, 64, 4
        $region40: #{tpu_custom_call.1} parent=11 // pred_fallthru
          _
      $region12: #{tpu_custom_call.1} parent=5 // pred_fallthru
        _
      %p383 = scmp.lt.s32.totalorder %s36, 2
      // Predicated region
      $region41: #{tpu_custom_call.1} parent=5 // pred_check
        %p384 = pneg %p383
      $region42: #{tpu_custom_call.1} parent=5 // pred_check_branch
        %386 = sbr.rel (%p384) target = $region44
      $region43: #{tpu_custom_call.1} parent=5 // pred_region
        // Predicated region
        $region45: #{tpu_custom_call.1} parent=43 // pred_check
          %p387 = pneg %p70
        $region46: #{tpu_custom_call.1} parent=43 // pred_check_branch
          %389 = sbr.rel (%p387) target = $region48
        $region47: #{tpu_custom_call.1} parent=43 // pred_region
          %s390 = sand.u32 %s60, 1
          %s391 = scalar_lea.sflag [#allocation5], %s390
          %s392 = sand.u32 %s60, 1
          %s393 = smul.addr %s392, 4
          %s394 = scalar_lea.vmem [#allocation4], %s393
          %396 = vsyncadd %s391, 0
          %s397 = sadd.s32 %s44, %s43
          %s398 = smul.addr %s397, 4
          %s399 = scalar_lea.hbm %s1, %s398
          %s401 = sshll.u32 %s399, 4
          %s402 = int_to_ptr.hbm [resolvable:$true] %s401
          %s403 = sshll.u32 %s394, 4
          %s404 = int_to_ptr.vmem [resolvable:$true] %s403
          %406 = dma.hbm_to_vmem [thread:$0]  %s402, 64, %s404, %s391
        $region48: #{tpu_custom_call.1} parent=43 // pred_fallthru
          _
        // Predicated region
        $region49: #{tpu_custom_call.1} parent=43 // pred_check
          %p407 = pneg %p96
        $region50: #{tpu_custom_call.1} parent=43 // pred_check_branch
          %409 = sbr.rel (%p407) target = $region52
        $region51: #{tpu_custom_call.1} parent=43 // pred_region
          %s410 = sand.u32 %s36, 1
          %s411 = scalar_lea.sflag [#allocation8], %s410
          %s412 = sand.u32 %s86, 1
          %s413 = smul.addr %s412, 4
          %s414 = scalar_lea.vmem [#allocation7], %s413
          %416 = vsyncadd %s411, 0
          %s417 = smul.addr %s43, 4
          %s418 = scalar_lea.hbm %s2, %s417
          %s420 = sshll.u32 %s418, 4
          %s421 = int_to_ptr.hbm [resolvable:$true] %s420
          %s422 = sshll.u32 %s414, 4
          %s423 = int_to_ptr.vmem [resolvable:$true] %s422
          %425 = dma.hbm_to_vmem [thread:$0]  %s421, 64, %s423, %s411
        $region52: #{tpu_custom_call.1} parent=43 // pred_fallthru
          _
        // Predicated region
        $region53: #{tpu_custom_call.1} parent=43 // pred_check
          %p426 = pneg %p122
        $region54: #{tpu_custom_call.1} parent=43 // pred_check_branch
          %428 = sbr.rel (%p426) target = $region56
        $region55: #{tpu_custom_call.1} parent=43 // pred_region
          %s429 = sand.u32 %s36, 1
          %s430 = scalar_lea.sflag [#allocation8], %s429
          %s431 = sand.u32 %s112, 1
          %s432 = smul.addr %s431, 4
          %s433 = scalar_lea.vmem [#allocation9], %s432
          %435 = vsyncadd %s430, 0
          %s436 = smul.addr %s43, 4
          %s437 = scalar_lea.hbm %s3, %s436
          %s439 = sshll.u32 %s437, 4
          %s440 = int_to_ptr.hbm [resolvable:$true] %s439
          %s441 = sshll.u32 %s433, 4
          %s442 = int_to_ptr.vmem [resolvable:$true] %s441
          %444 = dma.hbm_to_vmem [thread:$0]  %s440, 64, %s442, %s430
        $region56: #{tpu_custom_call.1} parent=43 // pred_fallthru
          _
      $region44: #{tpu_custom_call.1} parent=5 // pred_fallthru
        _
      %p445 = scmp.le.s32.totalorder 1, %s36
      %p446 = scmp.lt.s32.totalorder %s36, 3
      %p447 = pnand %p445, %p446
      %p448 = pneg %p447
      // Predicated region
      $region57: #{tpu_custom_call.1} parent=5 // pred_check
        _
      $region58: #{tpu_custom_call.1} parent=5 // pred_check_branch
        %450 = sbr.rel (%p447) target = $region60
      $region59: #{tpu_custom_call.1} parent=5 // pred_region
        %s451 = ssub.s32 %s36, 1
        %s452 = sand.u32 %s63, 1
        %s453 = scalar_lea.sflag [#allocation5], %s452
        %s454 = sand.u32 %s63, 1
        %s455 = smul.addr %s454, 4
        %s456 = scalar_lea.vmem [#allocation4], %s455
        // Predicated region
        $region61: #{tpu_custom_call.1} parent=59 // pred_check
          %p457 = pneg %p76
        $region62: #{tpu_custom_call.1} parent=59 // pred_check_branch
          %459 = sbr.rel (%p457) target = $region64
        $region63: #{tpu_custom_call.1} parent=59 // pred_region
          %461 = dma.done %s453, 64
        $region64: #{tpu_custom_call.1} parent=59 // pred_fallthru
          _
        %s462 = sand.u32 %s41, 1
        %s463 = scalar_lea.sflag [#allocation8], %s462
        %s464 = sand.u32 %s89, 1
        %s465 = smul.addr %s464, 4
        %s466 = scalar_lea.vmem [#allocation7], %s465
        // Predicated region
        $region65: #{tpu_custom_call.1} parent=59 // pred_check
          %p467 = pneg %p102
        $region66: #{tpu_custom_call.1} parent=59 // pred_check_branch
          %469 = sbr.rel (%p467) target = $region68
        $region67: #{tpu_custom_call.1} parent=59 // pred_region
          %471 = dma.done %s463, 64
        $region68: #{tpu_custom_call.1} parent=59 // pred_fallthru
          _
        %s472 = sand.u32 %s41, 1
        %s473 = scalar_lea.sflag [#allocation8], %s472
        %s474 = sand.u32 %s115, 1
        %s475 = smul.addr %s474, 4
        %s476 = scalar_lea.vmem [#allocation9], %s475
        // Predicated region
        $region69: #{tpu_custom_call.1} parent=59 // pred_check
          %p477 = pneg %p128
        $region70: #{tpu_custom_call.1} parent=59 // pred_check_branch
          %479 = sbr.rel (%p477) target = $region72
        $region71: #{tpu_custom_call.1} parent=59 // pred_region
          %481 = dma.done %s473, 64
        $region72: #{tpu_custom_call.1} parent=59 // pred_fallthru
          _
        // Predicated region
        $region73: #{tpu_custom_call.1} parent=59 // pred_check
          %p482 = pneg %p149
        $region74: #{tpu_custom_call.1} parent=59 // pred_check_branch
          %484 = sbr.rel (%p482) target = $region76
        $region75: #{tpu_custom_call.1} parent=59 // pred_region
          %486 = dma.done [#allocation11], 256
        $region76: #{tpu_custom_call.1} parent=59 // pred_fallthru
          _
        // Predicated region
        $region77: #{tpu_custom_call.1} parent=59 // pred_check
          %p487 = pneg %p191
        $region78: #{tpu_custom_call.1} parent=59 // pred_check_branch
          %489 = sbr.rel (%p487) target = $region80
        $region79: #{tpu_custom_call.1} parent=59 // pred_region
          %491 = dma.done [#allocation11], 256
        $region80: #{tpu_custom_call.1} parent=59 // pred_fallthru
          _
        // Predicated region
        $region81: #{tpu_custom_call.1} parent=59 // pred_check
          %p492 = pneg %p233
        $region82: #{tpu_custom_call.1} parent=59 // pred_check_branch
          %494 = sbr.rel (%p492) target = $region84
        $region83: #{tpu_custom_call.1} parent=59 // pred_region
          %496 = dma.done [#allocation14], 256
        $region84: #{tpu_custom_call.1} parent=59 // pred_fallthru
          _
        // Predicated region
        $region85: #{tpu_custom_call.1} parent=59 // pred_check
          %p497 = pneg %p275
        $region86: #{tpu_custom_call.1} parent=59 // pred_check_branch
          %499 = sbr.rel (%p497) target = $region88
        $region87: #{tpu_custom_call.1} parent=59 // pred_region
          %501 = dma.done [#allocation14], 512
        $region88: #{tpu_custom_call.1} parent=59 // pred_fallthru
          _
        %s502 = sand.u32 %s63, 1
        %s503 = scalar_lea.sflag [#allocation5], %s502
        %s504 = sand.u32 %s63, 1
        %s505 = smul.addr %s504, 4
        %s506 = scalar_lea.vmem [#allocation4], %s505
        %p507 = pneg %p76
        %p508 = pneg %p73
        %s509 = sand.u32 %s41, 1
        %s510 = scalar_lea.sflag [#allocation8], %s509
        %s511 = sand.u32 %s89, 1
        %s512 = smul.addr %s511, 4
        %s513 = scalar_lea.vmem [#allocation7], %s512
        %p514 = pneg %p102
        %p515 = pneg %p99
        %s516 = sand.u32 %s41, 1
        %s517 = scalar_lea.sflag [#allocation8], %s516
        %s518 = sand.u32 %s115, 1
        %s519 = smul.addr %s518, 4
        %s520 = scalar_lea.vmem [#allocation9], %s519
        %p521 = pneg %p128
        %p522 = pneg %p125
        %p523 = pneg %p149
        %p524 = pneg %p146
        %p525 = pneg %p170
        %p526 = pneg %p167
        %p527 = pneg %p191
        %p528 = pneg %p188
        %p529 = pneg %p212
        %p530 = pneg %p209
        %p531 = pneg %p233
        %p532 = pneg %p230
        %p533 = pneg %p254
        %p534 = pneg %p251
        %p535 = pneg %p275
        %p536 = pneg %p272
        %p537 = pneg %p303
        %p538 = pneg %p300
        %s539 = sand.u32 %s290, 1
        %s540 = scalar_lea.sflag [#allocation6], %s539
        %s541 = sand.u32 %s290, 1
        %s542 = smul.addr %s541, 8
        %s543 = scalar_lea.vmem [#allocation16], %s542
        %v545 = vld [vmem:[%s456] sm:$0xf]
        %v546 = vld [vmem:[%s466] sm:$0xf]
        %v547 = vld [vmem:[%s476] sm:$0xf]
        %v548 = vld [vmem:[#allocation10] sm:$0xf]
        %v549 = vld [vmem:[#allocation10 + $0x4] sm:$0xf]
        %v550 = vld [vmem:[#allocation10 + $0x8] sm:$0xf]
        %v551 = vld [vmem:[#allocation10 + $0xc] sm:$0xf]
        %v552 = vld [vmem:[%s5] sm:$0x1]
        %v554 = vperm.slane %v552, 0
        %v560 = vunpack.c.l.b16 %v548
        %v561 = vunpack.c.l.b16 %v549
        %v562 = vunpack.c.l.b16 %v550
        %v563 = vunpack.c.l.b16 %v551
        %v564 = vpack.c.b16 %v561, %v560
        %v565 = vpack.c.b16 %v563, %v562
        %vm568 = vcmask 261120
        %v570 = vsel %vm568, %v545, 0
        %572 = vmatpush.bf16.msra.mxu0 0
        %573 = vmatpush.bf16.msra.mxu0 0
        %574 = vmatpush.bf16.msra.mxu0 0
        %575 = vmatpush.bf16.msra.mxu0 0
        %576 = vmatpush.bf16.msra.mxu0 0
        %577 = vmatpush.bf16.msra.mxu0 0
        %578 = vmatpush.bf16.msra.mxu0 %v565
        %579 = vmatpush.bf16.msra.mxu0 %v564
        %580 = vmatmul.bf16.gmra.mxu0 %v570
        %v581 = vpop.f32.mrf.mxu0
        %v582 = vadd.f32 %v554, %v581
        %v583 = vpop.f32.mrf.mxu0
        %584 = vdwg.mxu0
        %v585 = vld [vmem:[#allocation12] sm:$0xf]
        %v586 = vld [vmem:[#allocation12 + $0x4] sm:$0xf]
        %v587 = vld [vmem:[#allocation12 + $0x8] sm:$0xf]
        %v588 = vld [vmem:[#allocation12 + $0xc] sm:$0xf]
        %v589 = vld [vmem:[%s7] sm:$0x1]
        %v591 = vperm.slane %v589, 0
        %v597 = vunpack.c.l.b16 %v585
        %v598 = vunpack.c.l.b16 %v586
        %v599 = vunpack.c.l.b16 %v587
        %v600 = vunpack.c.l.b16 %v588
        %v601 = vpack.c.b16 %v598, %v597
        %v602 = vpack.c.b16 %v600, %v599
        %v606 = vsel %vm568, %v546, 0
        %608 = vmatpush.bf16.msra.mxu0 0
        %609 = vmatpush.bf16.msra.mxu0 0
        %610 = vmatpush.bf16.msra.mxu0 0
        %611 = vmatpush.bf16.msra.mxu0 0
        %612 = vmatpush.bf16.msra.mxu0 0
        %613 = vmatpush.bf16.msra.mxu0 0
        %614 = vmatpush.bf16.msra.mxu0 %v602
        %615 = vmatpush.bf16.msra.mxu0 %v601
        %616 = vmatmul.bf16.gmra.mxu0 %v606
        %v617 = vpop.f32.mrf.mxu0
        %v618 = vadd.f32 %v591, %v617
        %v619 = vpop.f32.mrf.mxu0
        %620 = vdwg.mxu0
        %v621 = vld [vmem:[#allocation13] sm:$0xf]
        %v622 = vld [vmem:[#allocation13 + $0x4] sm:$0xf]
        %v623 = vld [vmem:[#allocation13 + $0x8] sm:$0xf]
        %v624 = vld [vmem:[#allocation13 + $0xc] sm:$0xf]
        %v625 = vld [vmem:[%s9] sm:$0x1]
        %v627 = vperm.slane %v625, 0
        %v633 = vunpack.c.l.b16 %v621
        %v634 = vunpack.c.l.b16 %v622
        %v635 = vunpack.c.l.b16 %v623
        %v636 = vunpack.c.l.b16 %v624
        %v637 = vpack.c.b16 %v634, %v633
        %v638 = vpack.c.b16 %v636, %v635
        %v642 = vsel %vm568, %v547, 0
        %644 = vmatpush.bf16.msra.mxu0 0
        %645 = vmatpush.bf16.msra.mxu0 0
        %646 = vmatpush.bf16.msra.mxu0 0
        %647 = vmatpush.bf16.msra.mxu0 0
        %648 = vmatpush.bf16.msra.mxu0 0
        %649 = vmatpush.bf16.msra.mxu0 0
        %650 = vmatpush.bf16.msra.mxu0 %v638
        %651 = vmatpush.bf16.msra.mxu0 %v637
        %652 = vmatmul.bf16.gmra.mxu0 %v642
        %v653 = vpop.f32.mrf.mxu0
        %v654 = vadd.f32 %v627, %v653
        %v655 = vpop.f32.mrf.mxu0
        %656 = vdwg.mxu0
        %v657 = vmul.f32 %v582, 0.25
        %v658 = vpack.c.bf16 %v657, %v657
        %v659 = vpack.c.bf16 %v618, %v618
        %v660 = vpack.c.bf16 %v654, %v654
        %s661 = sld [smem:[#allocation3 + %s45]]
        %v662 = vlaneseq
        %v663 = vand.u32 %v662, 127
        %v664 = vstv %s661
        %vm665 = vcmp.lt.s32.totalorder %v663, %v664
        %vm666 = vcmask 130048
        %v668 = vsel %vm666, %v658, 0
        %v671 = vsel %vm666, %v659, 0
        %673 = vmatpush.bf16.xpose.msra.mxu0 0
        %674 = vmatpush.bf16.xpose.msra.mxu0 0
        %675 = vmatpush.bf16.xpose.msra.mxu0 0
        %676 = vmatpush.bf16.xpose.msra.mxu0 0
        %677 = vmatpush.bf16.xpose.msra.mxu0 0
        %678 = vmatpush.bf16.xpose.msra.mxu0 0
        %679 = vmatpush.bf16.xpose.msra.mxu0 0
        %680 = vmatpush.bf16.xpose.msra.mxu0 %v671
        %681 = vmatmul.bf16.gmra.mxu0 %v668
        %v682 = vpop.f32.mrf.mxu0
        %v683 = vadd.f32 0.0, %v682
        %v684 = vpop.f32.mrf.mxu0
        %685 = vdwg.mxu0
        %v686 = vsel %vm665, %v683, -1000000.0
        %vm687 = vcmask 64512
        %v688 = vsel %vm687, %v686, -inf
        %689 = vmax.xlane.f32.xlu0 %v688
        %v690 = vpop.xlane.xlu0 %689
        %v691 = vsub.f32 %v686, %v690
        %v692 = vmul.f32 %v691, 1.442695
        %v693 = vpow.pop %v692
        %v694 = vsel %vm687, %v693, 0.0
        %695 = vadd.xlane.f32.xlu0 %v694
        %v696 = vpop.xlane.xlu0 %695
        %v697 = vrcp.pop %v696
        %v698 = vmul.f32 %v693, %v697
        %v699 = vpack.c.bf16 %v698, %v698
        %v701 = vsel %vm687, %v699, 0
        %vm703 = vcmask 1043456
        %v705 = vsel %vm703, %v660, 0
        %707 = vmatpush.bf16.msra.mxu0 0
        %708 = vmatpush.bf16.msra.mxu0 0
        %709 = vmatpush.bf16.msra.mxu0 0
        %710 = vmatpush.bf16.msra.mxu0 0
        %711 = vmatpush.bf16.msra.mxu0 0
        %712 = vmatpush.bf16.msra.mxu0 0
        %713 = vmatpush.bf16.msra.mxu0 0
        %714 = vmatpush.bf16.msra.mxu0 %v705
        %715 = vmatmul.bf16.gmra.mxu0 %v701
        %v716 = vpop.f32.mrf.mxu0
        %v717 = vadd.f32 0.0, %v716
        %v718 = vpop.f32.mrf.mxu0
        %719 = vdwg.mxu0
        %v720 = vpack.c.bf16 %v717, %v717
        %v721 = vld [vmem:[#allocation15] sm:$0xf]
        %v722 = vld [vmem:[#allocation15 + $0x4] sm:$0xf]
        %v724 = vunpack.c.l.b16 %v658
        %v725 = vpack.c.b16 %v724, %v724
        %726 = vrot.lane.b32.xlu0 %v725, 112
        %v727 = vpop.permute.xlu0 %726
        %v729 = vunpack.c.l.b16 %v659
        %v730 = vpack.c.b16 %v729, %v729
        %731 = vrot.lane.b32.xlu0 %v730, 112
        %v732 = vpop.permute.xlu0 %731
        %v734 = vsel %vm666, %v727, 0
        %v737 = vsel %vm666, %v732, 0
        %739 = vmatpush.bf16.xpose.msra.mxu0 0
        %740 = vmatpush.bf16.xpose.msra.mxu0 0
        %741 = vmatpush.bf16.xpose.msra.mxu0 0
        %742 = vmatpush.bf16.xpose.msra.mxu0 0
        %743 = vmatpush.bf16.xpose.msra.mxu0 0
        %744 = vmatpush.bf16.xpose.msra.mxu0 0
        %745 = vmatpush.bf16.xpose.msra.mxu0 0
        %746 = vmatpush.bf16.xpose.msra.mxu0 %v737
        %747 = vmatmul.bf16.gmra.mxu0 %v734
        %v748 = vpop.f32.mrf.mxu0
        %v749 = vadd.f32 0.0, %v748
        %v750 = vpop.f32.mrf.mxu0
        %751 = vdwg.mxu0
        %v752 = vsel %vm665, %v749, -1000000.0
        %v753 = vsel %vm687, %v752, -inf
        %754 = vmax.xlane.f32.xlu0 %v753
        %v755 = vpop.xlane.xlu0 %754
        %v756 = vsub.f32 %v752, %v755
        %v757 = vmul.f32 %v756, 1.442695
        %v758 = vpow.pop %v757
        %v759 = vsel %vm687, %v758, 0.0
        %760 = vadd.xlane.f32.xlu0 %v759
        %v761 = vpop.xlane.xlu0 %760
        %v762 = vrcp.pop %v761
        %v763 = vmul.f32 %v758, %v762
        %v764 = vpack.c.bf16 %v763, %v763
        %v766 = vunpack.c.l.b16 %v660
        %v767 = vpack.c.b16 %v766, %v766
        %768 = vrot.lane.b32.xlu0 %v767, 112
        %v769 = vpop.permute.xlu0 %768
        %v771 = vsel %vm687, %v764, 0
        %v774 = vsel %vm703, %v769, 0
        %776 = vmatpush.bf16.msra.mxu0 0
        %777 = vmatpush.bf16.msra.mxu0 0
        %778 = vmatpush.bf16.msra.mxu0 0
        %779 = vmatpush.bf16.msra.mxu0 0
        %780 = vmatpush.bf16.msra.mxu0 0
        %781 = vmatpush.bf16.msra.mxu0 0
        %782 = vmatpush.bf16.msra.mxu0 0
        %783 = vmatpush.bf16.msra.mxu0 %v774
        %784 = vmatmul.bf16.gmra.mxu0 %v771
        %v785 = vpop.f32.mrf.mxu0
        %v786 = vadd.f32 0.0, %v785
        %v787 = vpop.f32.mrf.mxu0
        %788 = vdwg.mxu0
        %v789 = vpack.c.bf16 %v786, %v786
        %v790 = vld [vmem:[#allocation15 + $0x8] sm:$0xf]
        %v791 = vld [vmem:[#allocation15 + $0xc] sm:$0xf]
        %v794 = vunpack.c.l.b16 %v790
        %v795 = vunpack.c.l.b16 %v791
        %v796 = vpack.c.b16 %v795, %v794
        %v799 = vsel %vm666, %v789, 0
        %801 = vmatpush.bf16.msra.mxu0 0
        %802 = vmatpush.bf16.msra.mxu0 0
        %803 = vmatpush.bf16.msra.mxu0 0
        %804 = vmatpush.bf16.msra.mxu0 0
        %805 = vmatpush.bf16.msra.mxu0 0
        %806 = vmatpush.bf16.msra.mxu0 0
        %807 = vmatpush.bf16.msra.mxu0 0
        %808 = vmatpush.bf16.msra.mxu0 %v796
        %809 = vmatmul.bf16.gmra.mxu0 %v799
        %v810 = vpop.f32.mrf.mxu0
        %v811 = vadd.f32 0.0, %v810
        %v812 = vpop.f32.mrf.mxu0
        %813 = vdwg.mxu0
        %v816 = vunpack.c.l.b16 %v721
        %v817 = vunpack.c.l.b16 %v722
        %v818 = vpack.c.b16 %v817, %v816
        %v821 = vsel %vm666, %v720, 0
        %823 = vmatpush.bf16.msra.mxu0 0
        %824 = vmatpush.bf16.msra.mxu0 0
        %825 = vmatpush.bf16.msra.mxu0 0
        %826 = vmatpush.bf16.msra.mxu0 0
        %827 = vmatpush.bf16.msra.mxu0 0
        %828 = vmatpush.bf16.msra.mxu0 0
        %829 = vmatpush.bf16.msra.mxu0 0
        %830 = vmatpush.bf16.msra.mxu0 %v818
        %831 = vmatmul.bf16.gmra.mxu0 %v821
        %v832 = vpop.f32.mrf.mxu0
        %v833 = vadd.f32 %v811, %v832
        %v834 = vpop.f32.mrf.mxu0
        %835 = vdwg.mxu0
        %836 = vrot.lane.b32.xlu0 %v725, 96
        %v837 = vpop.permute.xlu0 %836
        %838 = vrot.lane.b32.xlu0 %v730, 96
        %v839 = vpop.permute.xlu0 %838
        %v841 = vsel %vm666, %v837, 0
        %v844 = vsel %vm666, %v839, 0
        %846 = vmatpush.bf16.xpose.msra.mxu0 0
        %847 = vmatpush.bf16.xpose.msra.mxu0 0
        %848 = vmatpush.bf16.xpose.msra.mxu0 0
        %849 = vmatpush.bf16.xpose.msra.mxu0 0
        %850 = vmatpush.bf16.xpose.msra.mxu0 0
        %851 = vmatpush.bf16.xpose.msra.mxu0 0
        %852 = vmatpush.bf16.xpose.msra.mxu0 0
        %853 = vmatpush.bf16.xpose.msra.mxu0 %v844
        %854 = vmatmul.bf16.gmra.mxu0 %v841
        %v855 = vpop.f32.mrf.mxu0
        %v856 = vadd.f32 0.0, %v855
        %v857 = vpop.f32.mrf.mxu0
        %858 = vdwg.mxu0
        %v859 = vsel %vm665, %v856, -1000000.0
        %v860 = vsel %vm687, %v859, -inf
        %861 = vmax.xlane.f32.xlu0 %v860
        %v862 = vpop.xlane.xlu0 %861
        %v863 = vsub.f32 %v859, %v862
        %v864 = vmul.f32 %v863, 1.442695
        %v865 = vpow.pop %v864
        %v866 = vsel %vm687, %v865, 0.0
        %867 = vadd.xlane.f32.xlu0 %v866
        %v868 = vpop.xlane.xlu0 %867
        %v869 = vrcp.pop %v868
        %v870 = vmul.f32 %v865, %v869
        %v871 = vpack.c.bf16 %v870, %v870
        %872 = vrot.lane.b32.xlu0 %v767, 96
        %v873 = vpop.permute.xlu0 %872
        %v875 = vsel %vm687, %v871, 0
        %v878 = vsel %vm703, %v873, 0
        %880 = vmatpush.bf16.msra.mxu0 0
        %881 = vmatpush.bf16.msra.mxu0 0
        %882 = vmatpush.bf16.msra.mxu0 0
        %883 = vmatpush.bf16.msra.mxu0 0
        %884 = vmatpush.bf16.msra.mxu0 0
        %885 = vmatpush.bf16.msra.mxu0 0
        %886 = vmatpush.bf16.msra.mxu0 0
        %887 = vmatpush.bf16.msra.mxu0 %v878
        %888 = vmatmul.bf16.gmra.mxu0 %v875
        %v889 = vpop.f32.mrf.mxu0
        %v890 = vadd.f32 0.0, %v889
        %v891 = vpop.f32.mrf.mxu0
        %892 = vdwg.mxu0
        %v893 = vpack.c.bf16 %v890, %v890
        %v894 = vld [vmem:[#allocation15 + $0x10] sm:$0xf]
        %v895 = vld [vmem:[#allocation15 + $0x14] sm:$0xf]
        %v898 = vunpack.c.l.b16 %v894
        %v899 = vunpack.c.l.b16 %v895
        %v900 = vpack.c.b16 %v899, %v898
        %v903 = vsel %vm666, %v893, 0
        %905 = vmatpush.bf16.msra.mxu0 0
        %906 = vmatpush.bf16.msra.mxu0 0
        %907 = vmatpush.bf16.msra.mxu0 0
        %908 = vmatpush.bf16.msra.mxu0 0
        %909 = vmatpush.bf16.msra.mxu0 0
        %910 = vmatpush.bf16.msra.mxu0 0
        %911 = vmatpush.bf16.msra.mxu0 0
        %912 = vmatpush.bf16.msra.mxu0 %v900
        %913 = vmatmul.bf16.gmra.mxu0 %v903
        %v914 = vpop.f32.mrf.mxu0
        %v915 = vadd.f32 0.0, %v914
        %v916 = vpop.f32.mrf.mxu0
        %917 = vdwg.mxu0
        %v918 = vadd.f32 %v833, %v915
        %919 = vrot.lane.b32.xlu0 %v725, 80
        %v920 = vpop.permute.xlu0 %919
        %921 = vrot.lane.b32.xlu0 %v730, 80
        %v922 = vpop.permute.xlu0 %921
        %v924 = vsel %vm666, %v920, 0
        %v927 = vsel %vm666, %v922, 0
        %929 = vmatpush.bf16.xpose.msra.mxu0 0
        %930 = vmatpush.bf16.xpose.msra.mxu0 0
        %931 = vmatpush.bf16.xpose.msra.mxu0 0
        %932 = vmatpush.bf16.xpose.msra.mxu0 0
        %933 = vmatpush.bf16.xpose.msra.mxu0 0
        %934 = vmatpush.bf16.xpose.msra.mxu0 0
        %935 = vmatpush.bf16.xpose.msra.mxu0 0
        %936 = vmatpush.bf16.xpose.msra.mxu0 %v927
        %937 = vmatmul.bf16.gmra.mxu0 %v924
        %v938 = vpop.f32.mrf.mxu0
        %v939 = vadd.f32 0.0, %v938
        %v940 = vpop.f32.mrf.mxu0
        %941 = vdwg.mxu0
        %v942 = vsel %vm665, %v939, -1000000.0
        %v943 = vsel %vm687, %v942, -inf
        %944 = vmax.xlane.f32.xlu0 %v943
        %v945 = vpop.xlane.xlu0 %944
        %v946 = vsub.f32 %v942, %v945
        %v947 = vmul.f32 %v946, 1.442695
        %v948 = vpow.pop %v947
        %v949 = vsel %vm687, %v948, 0.0
        %950 = vadd.xlane.f32.xlu0 %v949
        %v951 = vpop.xlane.xlu0 %950
        %v952 = vrcp.pop %v951
        %v953 = vmul.f32 %v948, %v952
        %v954 = vpack.c.bf16 %v953, %v953
        %955 = vrot.lane.b32.xlu0 %v767, 80
        %v956 = vpop.permute.xlu0 %955
        %v958 = vsel %vm687, %v954, 0
        %v961 = vsel %vm703, %v956, 0
        %963 = vmatpush.bf16.msra.mxu0 0
        %964 = vmatpush.bf16.msra.mxu0 0
        %965 = vmatpush.bf16.msra.mxu0 0
        %966 = vmatpush.bf16.msra.mxu0 0
        %967 = vmatpush.bf16.msra.mxu0 0
        %968 = vmatpush.bf16.msra.mxu0 0
        %969 = vmatpush.bf16.msra.mxu0 0
        %970 = vmatpush.bf16.msra.mxu0 %v961
        %971 = vmatmul.bf16.gmra.mxu0 %v958
        %v972 = vpop.f32.mrf.mxu0
        %v973 = vadd.f32 0.0, %v972
        %v974 = vpop.f32.mrf.mxu0
        %975 = vdwg.mxu0
        %v976 = vpack.c.bf16 %v973, %v973
        %v977 = vld [vmem:[#allocation15 + $0x18] sm:$0xf]
        %v978 = vld [vmem:[#allocation15 + $0x1c] sm:$0xf]
        %v981 = vunpack.c.l.b16 %v977
        %v982 = vunpack.c.l.b16 %v978
        %v983 = vpack.c.b16 %v982, %v981
        %v986 = vsel %vm666, %v976, 0
        %988 = vmatpush.bf16.msra.mxu0 0
        %989 = vmatpush.bf16.msra.mxu0 0
        %990 = vmatpush.bf16.msra.mxu0 0
        %991 = vmatpush.bf16.msra.mxu0 0
        %992 = vmatpush.bf16.msra.mxu0 0
        %993 = vmatpush.bf16.msra.mxu0 0
        %994 = vmatpush.bf16.msra.mxu0 0
        %995 = vmatpush.bf16.msra.mxu0 %v983
        %996 = vmatmul.bf16.gmra.mxu0 %v986
        %v997 = vpop.f32.mrf.mxu0
        %v998 = vadd.f32 0.0, %v997
        %v999 = vpop.f32.mrf.mxu0
        %1000 = vdwg.mxu0
        %v1001 = vadd.f32 %v918, %v998
        %1002 = vst [vmem:[%s543] sm:$0xff] %v1001
        %s1003 = sand.u32 %s290, 1
        %s1004 = scalar_lea.sflag [#allocation6], %s1003
        %s1005 = sand.u32 %s290, 1
        %s1006 = smul.addr %s1005, 8
        %s1007 = scalar_lea.vmem [#allocation16], %s1006
        // Predicated region
        $region89: #{tpu_custom_call.1} parent=59 // pred_check
          %p1008 = pneg %p300
        $region90: #{tpu_custom_call.1} parent=59 // pred_check_branch
          %1010 = sbr.rel (%p1008) target = $region92
        $region91: #{tpu_custom_call.1} parent=59 // pred_region
          %1012 = vsyncadd %s1004, 0
          %s1013 = sadd.s32 %s46, %s45
          %s1014 = smul.addr %s1013, 8
          %s1015 = scalar_lea.hbm %s11, %s1014
          %s1017 = sshll.u32 %s1007, 4
          %s1018 = int_to_ptr.vmem [resolvable:$true] %s1017
          %s1019 = sshll.u32 %s1015, 4
          %s1020 = int_to_ptr.hbm [resolvable:$true] %s1019
          %1022 = dma.vmem_to_hbm [thread:$0]  %s1018, 128, %s1020, %s1004
        $region92: #{tpu_custom_call.1} parent=59 // pred_fallthru
          _
      $region60: #{tpu_custom_call.1} parent=5 // pred_fallthru
        _
      %p1023 = scmp.le.s32.totalorder 2, %s36
      // Predicated region
      $region93: #{tpu_custom_call.1} parent=5 // pred_check
        %p1024 = pneg %p1023
      $region94: #{tpu_custom_call.1} parent=5 // pred_check_branch
        %1026 = sbr.rel (%p1024) target = $region96
      $region95: #{tpu_custom_call.1} parent=5 // pred_region
        %s1027 = ssub.s32 %s36, 2
        // Predicated region
        $region97: #{tpu_custom_call.1} parent=95 // pred_check
          %p1028 = pneg %p306
        $region98: #{tpu_custom_call.1} parent=95 // pred_check_branch
          %1030 = sbr.rel (%p1028) target = $region100
        $region99: #{tpu_custom_call.1} parent=95 // pred_region
          %s1031 = sand.u32 %s291, 1
          %s1032 = scalar_lea.sflag [#allocation6], %s1031
          %s1033 = sand.u32 %s291, 1
          %s1034 = smul.addr %s1033, 8
          %s1035 = scalar_lea.vmem [#allocation16], %s1034
          %1037 = dma.done %s1032, 128
        $region100: #{tpu_custom_call.1} parent=95 // pred_fallthru
          _
      $region96: #{tpu_custom_call.1} parent=5 // pred_fallthru
        _
    $region6: #{tpu_custom_call.1} parent=1 // loop_footer
      %s40 = sadd.s32 1, %s36
    $region7: #{tpu_custom_call.1} parent=1 // loop_footer_branch
      %35 = sbr.rel target = $region3
    $region8: #{tpu_custom_call.1} parent=1 // loop_exit
      _
    %1038 = vsyncpa [#allocation5], 1
    %s1039 = scalar_lea.sflag [#allocation5], 1
    %1040 = vsyncpa %s1039, 1
    %1041 = vsyncpa [#allocation8], 1
    %s1042 = scalar_lea.sflag [#allocation8], 1
    %1043 = vsyncpa %s1042, 1
    %1044 = vsyncpa [#allocation11], 1
    %1045 = vsyncpa [#allocation14], 1
    %1046 = vsyncpa [#allocation6], 1
    %s1047 = scalar_lea.sflag [#allocation6], 1
    %1048 = vsyncpa %s1047, 1

</llo_original>
